<compile_context>
chip_gen: v6e
topology: v6e:2x2x1
jax: 0.10.0
libtpu: 0.0.40
codegen_flags: <defaults>
</compile_context>

<pallas_src>
import functools

import jax
import jax.numpy as jnp
from jax.experimental import pallas as pl
from jax.experimental.pallas import tpu as pltpu


def _ce_label_smooth_kernel(logits_ref, targets_ref, out_ref, acc_ref, *,
                            epsilon: float, num_classes: int,
                            batch_size: int, tile_b: int):
    # logits_ref : (TILE_B, C) in VMEM (input dtype, upcast below)
    # targets_ref: (TILE_B, 1) int32 in VMEM
    # out_ref    : (1, 1) f32 in SMEM  (final scalar loss)
    # acc_ref    : (1, 1) f32 SMEM scratch (running loss sum)
    i = pl.program_id(0)

    @pl.when(i == 0)
    def _init():
        acc_ref[0, 0] = 0.0

    x = logits_ref[...].astype(jnp.float32)                       # (tb, C)
    tb, C = x.shape

    # --- numerically stable log-softmax pieces (no full log_probs needed) ---
    m = jnp.max(x, axis=1, keepdims=True)                         # (tb, 1)
    shifted = x - m                                               # (tb, C)
    lse = jnp.log(jnp.sum(jnp.exp(shifted), axis=1, keepdims=True))  # (tb, 1)

    # --- smoothed CE without materializing one-hot / smooth targets ---
    # loss_row = -( (1-eps) * log_prob[target] + (eps/C) * sum_c log_prob[c] )
    tgt = targets_ref[...]                                        # (tb, 1) int32
    class_ids = jax.lax.broadcasted_iota(jnp.int32, (tb, C), 1)   # (tb, C)
    picked_shift = jnp.sum(jnp.where(class_ids == tgt, shifted, 0.0),
                           axis=1, keepdims=True)                 # (tb, 1)
    picked_logprob = picked_shift - lse                           # (tb, 1)
    row_logprob_sum = jnp.sum(shifted, axis=1, keepdims=True) - C * lse  # (tb, 1)

    per_row = ((1.0 - epsilon) * picked_logprob
               + (epsilon / num_classes) * row_logprob_sum)       # (tb, 1)

    # --- mask rows of a padded (partial) last tile ---
    row_ids = i * tile_b + jax.lax.broadcasted_iota(jnp.int32, (tb, 1), 0)
    per_row = jnp.where(row_ids < batch_size, per_row, 0.0)

    acc_ref[0, 0] += -jnp.sum(per_row)

    @pl.when(i == pl.num_programs(0) - 1)
    def _finalize():
        # (-t * log_p).mean(0).sum()  ==  sum_rows(loss_row) / B
        out_ref[0, 0] = acc_ref[0, 0] / batch_size


def _pick_tile_b(B: int, C: int, itemsize: int,
                 budget_bytes: int = 8 * 1024 * 1024) -> int:
    """Rows per tile so a double-buffered logits block stays small (~2x8 MiB),
    well inside scoped VMEM on v5e/v6e/v7x."""
    rows = max(8, budget_bytes // max(C * itemsize, 1))
    rows = max(8, (rows // 8) * 8)                 # sublane-aligned
    rows = min(rows, max(8, ((B + 7) // 8) * 8))   # never exceed padded batch
    return rows


def cross_entropy_label_smooth(logits: jax.Array, targets: jax.Array,
                               epsilon: float, *, tile_b: int | None = None
                               ) -> jax.Array:
    """Label-smoothed cross-entropy. logits: [B, C] float (f32 or bf16),
    targets: [B] int class indices. Returns a scalar f32 loss."""
    B, C = logits.shape
    targets2d = targets.reshape(B, 1).astype(jnp.int32)

    if tile_b is None:
        tile_b = _pick_tile_b(B, C, jnp.dtype(logits.dtype).itemsize)
    assert tile_b % 8 == 0, "tile_b must be sublane-aligned (multiple of 8)"

    grid = (pl.cdiv(B, tile_b),)

    kernel = functools.partial(_ce_label_smooth_kernel,
                               epsilon=float(epsilon), num_classes=C,
                               batch_size=B, tile_b=tile_b)

    out = pl.pallas_call(
        kernel,
        out_shape=jax.ShapeDtypeStruct((1, 1), jnp.float32),
        grid_spec=pltpu.PrefetchScalarGridSpec(
            num_scalar_prefetch=0,
            grid=grid,
            in_specs=[
                pl.BlockSpec((tile_b, C), lambda i: (i, 0)),  # logits tile
                pl.BlockSpec((tile_b, 1), lambda i: (i, 0)),  # targets column
            ],
            out_specs=pl.BlockSpec(memory_space=pltpu.SMEM),  # scalar loss
            scratch_shapes=[pltpu.SMEM((1, 1), jnp.float32)], # loss accumulator
        ),
        compiler_params=pltpu.CompilerParams(
            # batch axis carries the scalar accumulator -> "arbitrary"
            dimension_semantics=("arbitrary",),
            vmem_limit_bytes=32 * 1024 * 1024,
        ),
    )(logits, targets2d)
    return out[0, 0]


def _reference(logits, targets, epsilon):
    # Plain-JAX reference mirroring the PyTorch forward exactly.
    B, C = logits.shape
    x = logits.astype(jnp.float32)
    log_probs = x - jax.scipy.special.logsumexp(x, axis=1, keepdims=True)
    onehot = jax.nn.one_hot(targets, C, dtype=jnp.float32)
    smooth = (1.0 - epsilon) * onehot + epsilon / C
    return jnp.sum(jnp.mean(-smooth * log_probs, axis=0))


if __name__ == "__main__":
    key = jax.random.PRNGKey(0)
    k_logits, k_tgt = jax.random.split(key)

    NUM_CLASSES = 128      # class axis aligned to the 128-wide lane dimension
    EPSILON = 0.1

    # Case 1: batch divisible by tile (exercises multi-tile accumulation).
    B1 = 16
    logits1 = jax.random.normal(k_logits, (B1, NUM_CLASSES), dtype=jnp.float32)
    targets1 = jax.random.randint(k_tgt, (B1,), 0, NUM_CLASSES, dtype=jnp.int32)
    loss1 = jax.block_until_ready(
        cross_entropy_label_smooth(logits1, targets1, EPSILON, tile_b=8))
    ref1 = _reference(logits1, targets1, EPSILON)
    assert jnp.allclose(loss1, ref1, rtol=1e-5, atol=1e-5), (loss1, ref1)

    # Case 2: partial last tile (exercises the padded-row mask).
    B2 = 12
    logits2 = logits1[:B2]
    targets2 = targets1[:B2]
    loss2 = jax.block_until_ready(
        cross_entropy_label_smooth(logits2, targets2, EPSILON, tile_b=8))
    ref2 = _reference(logits2, targets2, EPSILON)
    assert jnp.allclose(loss2, ref2, rtol=1e-5, atol=1e-5), (loss2, ref2)

    print("KERNEL_OK")
</pallas_src>

<mosaic_0001>
module attributes {stable_mosaic.version = 11 : i64} {
  func.func @_ce_label_smooth_kernel(%arg0: i32, %arg1: memref<8x128xf32, #tpu.memory_space<vmem>>, %arg2: memref<8x1xi32, #tpu.memory_space<vmem>>, %arg3: memref<1x1xf32, #tpu.memory_space<smem>>, %arg4: memref<1x1xf32, #tpu.memory_space<smem>>) attributes {dimension_semantics = [#tpu.dimension_semantics<arbitrary>], iteration_bounds = array<i64: 2>, scalar_prefetch = 0 : i64, scratch_operands = 1 : i64, tpu.core_type = #tpu.core_type<tc>, window_params = [{transform_indices = @transform_0, window_bounds = array<i64: 8, 128>}, {transform_indices = @transform_1, window_bounds = array<i64: 8, 1>}, {transform_indices = @transform_2, window_bounds = array<i64: 1, 1>}]} {
    %c0_i32 = arith.constant 0 : i32
    %0 = arith.cmpi eq, %arg0, %c0_i32 : i32
    %1 = arith.extui %0 : i1 to i32
    %c0_i32_0 = arith.constant 0 : i32
    %2 = arith.cmpi ne, %1, %c0_i32_0 : i32
    scf.if %2 {
      %cst_19 = arith.constant 0.000000e+00 : f32
      %c0_20 = arith.constant 0 : index
      %c0_21 = arith.constant 0 : index
      %50 = memref.load %arg4[%c0_20, %c0_21] : memref<1x1xf32, #tpu.memory_space<smem>>
      memref.store %cst_19, %arg4[%c0_20, %c0_21] : memref<1x1xf32, #tpu.memory_space<smem>>
    } else {
    }
    %c0 = arith.constant 0 : index
    %c0_1 = arith.constant 0 : index
    %3 = vector.load %arg1[%c0, %c0_1] : memref<8x128xf32, #tpu.memory_space<vmem>>, vector<8x128xf32>
    %cst = arith.constant dense<0xFF800000> : vector<8xf32>
    %4 = vector.multi_reduction <maximumf>, %3, %cst [1] : vector<8x128xf32> to vector<8xf32>
    %5 = vector.shape_cast %4 : vector<8xf32> to vector<8x1xf32>
    %6 = vector.broadcast %5 : vector<8x1xf32> to vector<8x128xf32>
    %7 = arith.subf %3, %6 : vector<8x128xf32>
    %8 = math.exp %7 : vector<8x128xf32>
    %cst_2 = arith.constant dense<0.000000e+00> : vector<8xf32>
    %9 = vector.multi_reduction <add>, %8, %cst_2 [1] : vector<8x128xf32> to vector<8xf32>
    %10 = vector.shape_cast %9 : vector<8xf32> to vector<8x1xf32>
    %11 = math.log %10 : vector<8x1xf32>
    %c0_3 = arith.constant 0 : index
    %c0_4 = arith.constant 0 : index
    %12 = vector.load %arg2[%c0_3, %c0_4] : memref<8x1xi32, #tpu.memory_space<vmem>>, vector<8x1xi32>
    %13 = tpu.iota {dimensions = array<i32: 1>} : vector<8x128xi32>
    %14 = vector.broadcast %12 : vector<8x1xi32> to vector<8x128xi32>
    %15 = arith.cmpi eq, %13, %14 : vector<8x128xi32>
    %cst_5 = arith.constant 0.000000e+00 : f32
    %16 = vector.broadcast %cst_5 : f32 to vector<8x128xf32>
    %17 = arith.select %15, %7, %16 : vector<8x128xi1>, vector<8x128xf32>
    %cst_6 = arith.constant dense<0.000000e+00> : vector<8xf32>
    %18 = vector.multi_reduction <add>, %17, %cst_6 [1] : vector<8x128xf32> to vector<8xf32>
    %19 = vector.shape_cast %18 : vector<8xf32> to vector<8x1xf32>
    %20 = arith.subf %19, %11 : vector<8x1xf32>
    %cst_7 = arith.constant dense<0.000000e+00> : vector<8xf32>
    %21 = vector.multi_reduction <add>, %7, %cst_7 [1] : vector<8x128xf32> to vector<8xf32>
    %22 = vector.shape_cast %21 : vector<8xf32> to vector<8x1xf32>
    %cst_8 = arith.constant 1.280000e+02 : f32
    %23 = vector.broadcast %cst_8 : f32 to vector<8x1xf32>
    %24 = arith.mulf %23, %11 : vector<8x1xf32>
    %25 = arith.subf %22, %24 : vector<8x1xf32>
    %cst_9 = arith.constant 0.899999976 : f32
    %26 = vector.broadcast %cst_9 : f32 to vector<8x1xf32>
    %27 = arith.mulf %26, %20 : vector<8x1xf32>
    %cst_10 = arith.constant 7.812500e-04 : f32
    %28 = vector.broadcast %cst_10 : f32 to vector<8x1xf32>
    %29 = arith.mulf %28, %25 : vector<8x1xf32>
    %30 = arith.addf %27, %29 : vector<8x1xf32>
    %c8_i32 = arith.constant 8 : i32
    %31 = arith.muli %arg0, %c8_i32 : i32
    %32 = tpu.iota {dimensions = array<i32: 0>} : vector<8x1xi32>
    %33 = vector.broadcast %31 : i32 to vector<8x1xi32>
    %34 = arith.addi %33, %32 : vector<8x1xi32>
    %c16_i32 = arith.constant 16 : i32
    %35 = vector.broadcast %c16_i32 : i32 to vector<8x1xi32>
    %36 = arith.cmpi slt, %34, %35 : vector<8x1xi32>
    %cst_11 = arith.constant 0.000000e+00 : f32
    %37 = vector.broadcast %cst_11 : f32 to vector<8x1xf32>
    %38 = arith.select %36, %30, %37 : vector<8x1xi1>, vector<8x1xf32>
    %c0_12 = arith.constant 0 : index
    %c0_13 = arith.constant 0 : index
    %39 = memref.load %arg4[%c0_12, %c0_13] : memref<1x1xf32, #tpu.memory_space<smem>>
    %40 = vector.shape_cast %38 : vector<8x1xf32> to vector<1x8x1xf32>
    %cst_14 = arith.constant dense<0.000000e+00> : vector<1xf32>
    %41 = vector.multi_reduction <add>, %40, %cst_14 [1, 2] : vector<1x8x1xf32> to vector<1xf32>
    %42 = vector.shape_cast %41 : vector<1xf32> to vector<1x1x1xf32>
    %43 = vector.extract %42[0, 0, 0] : f32 from vector<1x1x1xf32>
    %cst_15 = arith.constant 0.000000e+00 : f32
    %44 = arith.subf %cst_15, %43 : f32
    %45 = arith.addf %39, %44 : f32
    %c0_16 = arith.constant 0 : index
    %c0_17 = arith.constant 0 : index
    %46 = memref.load %arg4[%c0_16, %c0_17] : memref<1x1xf32, #tpu.memory_space<smem>>
    memref.store %45, %arg4[%c0_16, %c0_17] : memref<1x1xf32, #tpu.memory_space<smem>>
    %c1_i32 = arith.constant 1 : i32
    %47 = arith.cmpi eq, %arg0, %c1_i32 : i32
    %48 = arith.extui %47 : i1 to i32
    %c0_i32_18 = arith.constant 0 : i32
    %49 = arith.cmpi ne, %48, %c0_i32_18 : i32
    scf.if %49 {
      %c0_19 = arith.constant 0 : index
      %c0_20 = arith.constant 0 : index
      %50 = memref.load %arg4[%c0_19, %c0_20] : memref<1x1xf32, #tpu.memory_space<smem>>
      %cst_21 = arith.constant 1.600000e+01 : f32
      %51 = arith.divf %50, %cst_21 : f32
      %c0_22 = arith.constant 0 : index
      %c0_23 = arith.constant 0 : index
      %52 = memref.load %arg3[%c0_22, %c0_23] : memref<1x1xf32, #tpu.memory_space<smem>>
      memref.store %51, %arg3[%c0_22, %c0_23] : memref<1x1xf32, #tpu.memory_space<smem>>
    } else {
    }
    return
  }
  func.func @transform_0(%arg0: i32) -> (i32, i32) {
    %c0_i32 = arith.constant 0 : i32
    %c0_i32_0 = arith.constant 0 : i32
    return %arg0, %c0_i32 : i32, i32
  }
  func.func @transform_1(%arg0: i32) -> (i32, i32) {
    %c0_i32 = arith.constant 0 : i32
    %c0_i32_0 = arith.constant 0 : i32
    return %arg0, %c0_i32 : i32, i32
  }
  func.func @transform_2(%arg0: i32) -> (i32, i32) {
    %c0_i32 = arith.constant 0 : i32
    %c0_i32_0 = arith.constant 0 : i32
    %c0_i32_1 = arith.constant 0 : i32
    return %c0_i32, %c0_i32_0 : i32, i32
  }
}

</mosaic_0001>

<llo_original>
// kernel: tpu_custom_call.1
$region0: #{tpu_custom_call.1}
  #allocation0 [shape = 'u32[]', space=smem, size = 0x4, offset = 0x4, fixed_abs, tag = 'smem constant byte address 0x4 - core index']
  #allocation1 [shape = 'u32[144,128]{1,0:T(1,128)}', space=vmem, size = 0x12000, scoped, tag = 'internal scratch']
  #allocation2 [shape = 'f32[1,1]{1,0:T(1,128)}', space=smem, size = 0x200, scoped, tag = 'scratch operand']
  %s0 = inlined_call_operand.vmem [shape: f32[16,128], index: 0, kind: input, shape index: {}]
  %s1 = inlined_call_operand.vmem [shape: s32[16,1], index: 1, kind: input, shape index: {}]
  %s2 = inlined_call_operand.hbm [shape: f32[1,1], index: 2, kind: output, shape index: {}]
  %s3 = sld [smem:[#allocation0]]
  $region49: #{tpu_custom_call.1} parent=0
    _
  %s5 = ssub.s32 1, %s3
  %s6 = scalar_select 0, %s5, %s3
  $region1: #{tpu_custom_call.1} parent=0
    #allocation3 [shape = 'u8[512]{0}', space=smem, size = 0x200, scoped, tag = 'output window, operand 0, single buffered']
    #allocation4 [shape = 's32[2]{0}', space=sflag, size = 0x8, scoped, tag = 'scoped memory for tpu_custom_call.1']
    %7 = vsyncpa [#allocation4], 0
    loop: start=0, step=1, limit=4
    $region2: #{tpu_custom_call.1} parent=1 // loop_pre_header
      _
    $region3: #{tpu_custom_call.1} parent=1 // loop_header
      %s9 = sphi 0, %s13
      %p10 = scmp.ge.s32.totalorder %s9, 4
      %s19 = sphi 0, %s21
      %s22 = sphi 0, %s19
      %s23 = sphi 0, %s22
      %s39 = sphi 0, %s23
      %s45 = sphi 0, %s47
      %s48 = sphi 0, %s45
      %s49 = sphi 0, %s48
      %s65 = sphi 0, %s49
      %s69 = sphi 0, %s69
      %s71 = sphi 0, %s69
      %s72 = sphi 0, %s71
      %s86 = sphi 0, %s72
    $region4: #{tpu_custom_call.1} parent=1 // loop_header_branch
      %12 = sbr.rel (%p10) target = $region8
    $region5: #{tpu_custom_call.1} parent=1 // loop_body
      %s14 = ssub.s32 %s9, 1
      %s15 = ssub.s32 %s9, 2
      %s16 = sadd.s32 %s9, 1
      %s17 = ssub.s32 %s9, %s16
      %p18 = scmp.eq.s32.totalorder %s17, 0
      %s20 = sadd.s32 %s19, 1
      %s21 = scalar_select %p18, %s19, %s20
      %p24 = pneg %p18
      %p25 = scmp.eq.s32.totalorder %s9, 1
      %p26 = por %p24, %p25
      %p27 = scmp.ne.s32.totalorder %s19, %s22
      %p28 = scmp.eq.s32.totalorder %s9, 0
      %p29 = por %p27, %p28
      %p30 = scmp.ne.s32.totalorder %s19, %s22
      %p31 = scmp.eq.s32.totalorder %s14, 1
      %p32 = por %p30, %p31
      %p33 = scmp.ne.s32.totalorder %s22, %s23
      %p34 = scmp.eq.s32.totalorder %s14, 0
      %p35 = por %p33, %p34
      %p36 = scmp.ne.s32.totalorder %s22, %s23
      %p37 = scmp.eq.s32.totalorder %s15, 1
      %p38 = por %p36, %p37
      %p40 = scmp.ne.s32.totalorder %s23, %s39
      %p41 = scmp.eq.s32.totalorder %s15, 0
      %p42 = por %p40, %p41
      %s43 = ssub.s32 %s9, %s16
      %p44 = scmp.eq.s32.totalorder %s43, 0
      %s46 = sadd.s32 %s45, 1
      %s47 = scalar_select %p44, %s45, %s46
      %p50 = pneg %p44
      %p51 = scmp.eq.s32.totalorder %s9, 1
      %p52 = por %p50, %p51
      %p53 = scmp.ne.s32.totalorder %s45, %s48
      %p54 = scmp.eq.s32.totalorder %s9, 0
      %p55 = por %p53, %p54
      %p56 = scmp.ne.s32.totalorder %s45, %s48
      %p57 = scmp.eq.s32.totalorder %s14, 1
      %p58 = por %p56, %p57
      %p59 = scmp.ne.s32.totalorder %s48, %s49
      %p60 = scmp.eq.s32.totalorder %s14, 0
      %p61 = por %p59, %p60
      %p62 = scmp.ne.s32.totalorder %s48, %s49
      %p63 = scmp.eq.s32.totalorder %s15, 1
      %p64 = por %p62, %p63
      %p66 = scmp.ne.s32.totalorder %s49, %s65
      %p67 = scmp.eq.s32.totalorder %s15, 0
      %p68 = por %p66, %p67
      %s70 = sadd.s32 %s69, 1
      %p73 = scmp.eq.s32.totalorder %s9, 1
      %p74 = scmp.ne.s32.totalorder %s69, %s71
      %p75 = scmp.eq.s32.totalorder %s9, 0
      %p76 = por %p74, %p75
      %p77 = scmp.ne.s32.totalorder %s69, %s71
      %p78 = scmp.eq.s32.totalorder %s14, 1
      %p79 = por %p77, %p78
      %p80 = scmp.ne.s32.totalorder %s71, %s72
      %p81 = scmp.eq.s32.totalorder %s14, 0
      %p82 = por %p80, %p81
      %p83 = scmp.ne.s32.totalorder %s71, %s72
      %p84 = scmp.eq.s32.totalorder %s15, 1
      %p85 = por %p83, %p84
      %p87 = scmp.ne.s32.totalorder %s72, %s86
      %p88 = scmp.eq.s32.totalorder %s15, 0
      %p89 = por %p87, %p88
      %p90 = scmp.le.s32.totalorder 1, %s9
      %p91 = scmp.lt.s32.totalorder %s9, 3
      %p92 = pnand %p90, %p91
      %p93 = pneg %p92
      // Predicated region
      $region9: #{tpu_custom_call.1} parent=5 // pred_check
        _
      $region10: #{tpu_custom_call.1} parent=5 // pred_check_branch
        %95 = sbr.rel (%p92) target = $region12
      $region11: #{tpu_custom_call.1} parent=5 // pred_region
        %s96 = ssub.s32 %s9, 1
      $region12: #{tpu_custom_call.1} parent=5 // pred_fallthru
        _
      %p97 = scmp.lt.s32.totalorder %s9, 2
      // Predicated region
      $region13: #{tpu_custom_call.1} parent=5 // pred_check
        %p98 = pneg %p97
      $region14: #{tpu_custom_call.1} parent=5 // pred_check_branch
        %100 = sbr.rel (%p98) target = $region16
      $region15: #{tpu_custom_call.1} parent=5 // pred_region
        // Predicated region
        $region17: #{tpu_custom_call.1} parent=15 // pred_check
          %p101 = pneg %p29
        $region18: #{tpu_custom_call.1} parent=15 // pred_check_branch
          %103 = sbr.rel (%p101) target = $region20
        $region19: #{tpu_custom_call.1} parent=15 // pred_region
          %p104 = scmp.lt.s32.totalorder %s9, 1
          %s105 = scalar_select %p104, %s9, 1
          %s106 = smul.addr %s105, 8
          %s107 = scalar_lea.vmem %s0, %s106
        $region20: #{tpu_custom_call.1} parent=15 // pred_fallthru
          _
        // Predicated region
        $region21: #{tpu_custom_call.1} parent=15 // pred_check
          %p108 = pneg %p55
        $region22: #{tpu_custom_call.1} parent=15 // pred_check_branch
          %110 = sbr.rel (%p108) target = $region24
        $region23: #{tpu_custom_call.1} parent=15 // pred_region
          %p111 = scmp.lt.s32.totalorder %s9, 1
          %s112 = scalar_select %p111, %s9, 1
          %s113 = smul.addr %s112, 8
          %s114 = scalar_lea.vmem %s1, %s113
        $region24: #{tpu_custom_call.1} parent=15 // pred_fallthru
          _
      $region16: #{tpu_custom_call.1} parent=5 // pred_fallthru
        _
      %p115 = scmp.le.s32.totalorder 1, %s9
      %p116 = scmp.lt.s32.totalorder %s9, 3
      %p117 = pnand %p115, %p116
      %p118 = pneg %p117
      // Predicated region
      $region25: #{tpu_custom_call.1} parent=5 // pred_check
        _
      $region26: #{tpu_custom_call.1} parent=5 // pred_check_branch
        %120 = sbr.rel (%p117) target = $region28
      $region27: #{tpu_custom_call.1} parent=5 // pred_region
        %s121 = ssub.s32 %s9, 1
        %p122 = scmp.lt.s32.totalorder %s14, 1
        %s123 = scalar_select %p122, %s14, 1
        %s124 = smul.addr %s123, 8
        %s125 = scalar_lea.vmem %s0, %s124
        %p126 = pneg %p35
        %p127 = pneg %p32
        %p128 = scmp.lt.s32.totalorder %s14, 1
        %s129 = scalar_select %p128, %s14, 1
        %s130 = smul.addr %s129, 8
        %s131 = scalar_lea.vmem %s1, %s130
        %p132 = pneg %p61
        %p133 = pneg %p58
        %p134 = pneg %p82
        %p135 = pneg %p79
        %p136 = scmp.lt.s32.totalorder %s14, 1
        %s137 = scalar_select %p136, %s14, 1
        %s138 = smul.addr %s137, 8
        %s139 = scalar_lea.vmem %s0, %s138
        %p140 = scmp.lt.s32.totalorder %s14, 1
        %s141 = scalar_select %p140, %s14, 1
        %s142 = smul.addr %s141, 8
        %s143 = scalar_lea.vmem %s1, %s142
        %p144 = scmp.eq.s32.totalorder %s14, 0
        // Predicated region
        $region29: #{tpu_custom_call.1} parent=27 // pred_check
          %p145 = pneg %p144
        $region30: #{tpu_custom_call.1} parent=27 // pred_check_branch
          %147 = sbr.rel (%p145) target = $region32
        $region31: #{tpu_custom_call.1} parent=27 // pred_region
          %s148 = scalar_lea.smem [#allocation2], 0
          %149 = sst [smem:[%s148]] 0.0
        $region32: #{tpu_custom_call.1} parent=27 // pred_fallthru
          _
        %v150 = vld [vmem:[%s139] sm:$0xff]
        %151 = vmax.xlane.f32.xlu0 %v150
        %v152 = vpop.xlane.xlu0 %151
        %v153 = vsub.f32 %v150, %v152
        %v154 = vmul.f32 %v153, 1.442695
        %v155 = vpow.pop %v154
        %156 = vadd.xlane.f32.xlu0 %v155
        %v157 = vpop.xlane.xlu0 %156
        %v158 = vlog2.pop %v157
        %v159 = vmul.f32 %v158, 0.6931472
        %v160 = vld [vmem:[%s143] sm:$0xff]
        %v161 = vlaneseq
        %v162 = vand.u32 %v161, 127
        %163 = vset.pattern.permute.xlu0 0
        %164 = vperm.xlu0 %163, %v160
        %v165 = vpop.permute.xlu0 %164
        %vm166 = vcmp.eq.s32.totalorder %v162, %v165
        %v167 = vsel %vm166, %v153, 0.0
        %168 = vadd.xlane.f32.xlu0 %v167
        %v169 = vpop.xlane.xlu0 %168
        %v170 = vsub.f32 %v169, %v159
        %171 = vadd.xlane.f32.xlu0 %v153
        %v172 = vpop.xlane.xlu0 %171
        %v173 = vmul.f32 %v159, 128.0
        %v174 = vsub.f32 %v172, %v173
        %v175 = vmul.f32 %v170, 0.9
        %v176 = vmul.f32 %v174, 0.00078125
        %v177 = vadd.f32 %v175, %v176
        %s178 = smul.u32 %s14, 8
        %v179 = vlaneseq
        %v180 = vshrl.u32 %v179, 7
        %v181 = vstv %s178
        %v182 = vadd.s32 %v181, %v180
        %vm183 = vcmp.lt.s32.totalorder %v182, 16
        %v184 = vsel %vm183, %v177, 0.0
        %s185 = sld [smem:[#allocation2]]
        %vm186 = vcmask 7168
        %v187 = vsel %vm186, %v184, 0.0
        %188 = vadd.xlane.f32.xlu0 %v187
        %v189 = vpop.xlane.xlu0 %188
        %v190 = vrot.slane %v189, 4
        %v191 = vadd.f32 %v189, %v190
        %v192 = vrot.slane %v191, 2
        %v193 = vadd.f32 %v191, %v192
        %v194 = vrot.slane %v193, 1
        %v195 = vadd.f32 %v193, %v194
        %s196 = vtos %v195
        %s197 = ssub.f32 0.0, %s196
        %s198 = sadd.f32 %s185, %s197
        %s199 = scalar_lea.smem [#allocation2], 0
        %200 = sst [smem:[%s199]] %s198
        %p201 = scmp.eq.s32.totalorder %s14, 1
        // Predicated region
        $region33: #{tpu_custom_call.1} parent=27 // pred_check
          %p202 = pneg %p201
        $region34: #{tpu_custom_call.1} parent=27 // pred_check_branch
          %204 = sbr.rel (%p202) target = $region36
        $region35: #{tpu_custom_call.1} parent=27 // pred_region
          %s205 = sld [smem:[#allocation2]]
          %v206 = vrcp.pop 16.0
          %s207 = vtos %v206
          %s208 = smul.f32 %s205, %s207
          %s209 = scalar_lea.smem [#allocation3], 0
          %210 = sst [smem:[%s209]] %s208
        $region36: #{tpu_custom_call.1} parent=27 // pred_fallthru
          _
        // Predicated region
        $region37: #{tpu_custom_call.1} parent=27 // pred_check
          %p211 = pneg %p79
        $region38: #{tpu_custom_call.1} parent=27 // pred_check_branch
          %213 = sbr.rel (%p211) target = $region40
        $region39: #{tpu_custom_call.1} parent=27 // pred_region
          %s215 = ssub.s32 16, 16
          %216 = vsyncadd [#allocation4], %s215
          %219 = dma.smem_to_hbm [#allocation3], 16, %s2, [#allocation4]
        $region40: #{tpu_custom_call.1} parent=27 // pred_fallthru
          _
        // Predicated region
        $region41: #{tpu_custom_call.1} parent=27 // pred_check
          %p220 = pneg %p79
        $region42: #{tpu_custom_call.1} parent=27 // pred_check_branch
          %222 = sbr.rel (%p220) target = $region44
        $region43: #{tpu_custom_call.1} parent=27 // pred_region
          %223 = dma.done [#allocation4], 16
        $region44: #{tpu_custom_call.1} parent=27 // pred_fallthru
          _
        %224 = sfence
      $region28: #{tpu_custom_call.1} parent=5 // pred_fallthru
        _
      %p225 = scmp.le.s32.totalorder 2, %s9
      // Predicated region
      $region45: #{tpu_custom_call.1} parent=5 // pred_check
        %p226 = pneg %p225
      $region46: #{tpu_custom_call.1} parent=5 // pred_check_branch
        %228 = sbr.rel (%p226) target = $region48
      $region47: #{tpu_custom_call.1} parent=5 // pred_region
        %s229 = ssub.s32 %s9, 2
      $region48: #{tpu_custom_call.1} parent=5 // pred_fallthru
        _
    $region6: #{tpu_custom_call.1} parent=1 // loop_footer
      %s13 = sadd.s32 1, %s9
    $region7: #{tpu_custom_call.1} parent=1 // loop_footer_branch
      %8 = sbr.rel target = $region3
    $region8: #{tpu_custom_call.1} parent=1 // loop_exit
      _
    %230 = vsyncpa [#allocation4], 1
    %s231 = scalar_lea.sflag [#allocation4], 1
    %232 = vsyncpa %s231, 1

</llo_original>
